<compile_context>
chip_gen: v6e
topology: v6e:2x2x1
jax: 0.10.0
libtpu: 0.0.40
codegen_flags: <defaults>
</compile_context>

<pallas_src>
import functools

import jax
import jax.numpy as jnp
from jax.experimental import pallas as pl
from jax.experimental.pallas import tpu as pltpu


def _moving_avg_kernel(x_ref, o_ref, pad_ref, *, kernel_size, stride, L, L_out,
                       pad, n_acc, head):
    """Replicate-padded moving average over the time (sublane) axis.

    x_ref:   (tb, L, tc)       input tile (batch-tile, time, lane-tile)
    o_ref:   (tb, L_out, tc)   output tile
    pad_ref: (tb, head+L+2*pad, tc) f32 scratch for the replicate-padded tile;
             rows [0, head) are extra replicas so the body lands 8-aligned.
    """
    tb, _, tc = x_ref.shape
    x = x_ref[...].astype(jnp.float32)            # cast the tile exactly once

    if pad > 0:
        body = head + pad                          # multiple of 8 -> aligned
        # [x0 replicas | body | x_{L-1} replicas], built with 3 stores.
        pad_ref[:, pl.ds(0, body), :] = jnp.broadcast_to(x[:, 0:1, :],
                                                         (tb, body, tc))
        pad_ref[:, pl.ds(body, L), :] = x
        pad_ref[:, pl.ds(body + L, pad), :] = jnp.broadcast_to(x[:, L - 1:L, :],
                                                               (tb, pad, tc))
        xp = pad_ref[...]                          # ONE aligned contiguous load
    else:
        xp = x                                     # no padding needed

    # Log-depth window sum (binary decomposition of kernel_size):
    #   seg_w[i] = sum_{j<w} padded[i+j]; doubling: seg_2w[i] = seg_w[i] + seg_w[i+w]
    # Every shift is a static sublane-offset slice of a vreg-resident value,
    # so there are ~2*ceil(log2(k)) slice+adds instead of k re-loads.
    seg, w = xp, 1
    res, off, rem = None, 0, kernel_size
    while rem:
        if rem & 1:
            s0 = head + off
            part = seg[:, s0:s0 + n_acc, :]
            res = part if res is None else res + part
            off += w
        rem >>= 1
        if rem:
            n = seg.shape[1] - w
            seg = seg[:, :n, :] + seg[:, w:w + n, :]
            w *= 2

    win = res if stride == 1 else res[:, ::stride, :]   # stride>1 unused in mrDiff
    o_ref[...] = (win * (1.0 / kernel_size)).astype(o_ref.dtype)


def _run_pallas(y, kernel_size, stride, L, L_out, pad, n_acc, head):
    """y: (Bp, L, Cp) in the layout we want to tile (no further copies)."""
    Bp, _, Cp = y.shape
    rows_scr = head + L + 2 * pad

    # ---- lane (channel) tile: full extent when small, else a multiple of 128
    #      chosen to give >= 2 lane tiles (megacore) while staying VMEM-friendly.
    if Cp <= 256:
        tc = Cp
    else:
        tc = min(512, -(-pl.cdiv(Cp, 2) // 128) * 128)
    n_c = pl.cdiv(Cp, tc)

    # ---- batch tile: fill ~28 MiB of VMEM (double-buffered blocks + f32
    #      working set / spill headroom under the 64 MiB limit), but keep
    #      >= 2 parallel grid steps when possible (v7x has 2 TensorCores).
    r8 = lambda n: -(-n // 8) * 8
    lanes = -(-tc // 128) * 128
    itemsize = jnp.dtype(y.dtype).itemsize
    per_b = (lanes * (2 * r8(L) + 2 * r8(L_out)) * itemsize
             + lanes * (r8(rows_scr) + 3 * r8(L + 2 * pad)) * 4)
    budget = 28 * 1024 * 1024
    tb = max(1, min(Bp, budget // max(per_b, 1)))
    if n_c == 1 and Bp >= 2:
        tb = min(tb, (Bp + 1) // 2)
    n_b = pl.cdiv(Bp, tb)

    kernel = functools.partial(
        _moving_avg_kernel, kernel_size=kernel_size, stride=stride, L=L,
        L_out=L_out, pad=pad, n_acc=n_acc, head=head)

    return pl.pallas_call(
        kernel,
        out_shape=jax.ShapeDtypeStruct((Bp, L_out, Cp), y.dtype),
        grid_spec=pltpu.PrefetchScalarGridSpec(
            num_scalar_prefetch=0,
            grid=(n_b, n_c),
            in_specs=[pl.BlockSpec((tb, L, tc), lambda bi, ci: (bi, 0, ci))],
            out_specs=pl.BlockSpec((tb, L_out, tc), lambda bi, ci: (bi, 0, ci)),
            scratch_shapes=[pltpu.VMEM((tb, rows_scr, tc), jnp.float32)],
        ),
        compiler_params=pltpu.CompilerParams(
            dimension_semantics=("parallel", "parallel"),
            vmem_limit_bytes=64 * 1024 * 1024),
    )(y)


def moving_avg(x, kernel_size, stride=1):
    """x: (B, L, C) -> (B, L_out, C): replicate-pad + AvgPool1d over time."""
    B, L, C = x.shape
    pad = (kernel_size - 1) // 2
    L_pad = L + 2 * pad
    assert L_pad >= kernel_size, "sequence too short for kernel_size"
    L_out = (L_pad - kernel_size) // stride + 1
    n_acc = (L_out - 1) * stride + 1
    head = (-pad) % 8                       # extra rows so the body is 8-aligned

    if C >= 128:
        # Natural layout: no wrapper permutes, kernel HBM traffic = read+write.
        return _run_pallas(x, kernel_size, stride, L, L_out, pad, n_acc, head)

    # Small channel count: pack (B, L, C) -> (1, L, B*C) so the lane axis is
    # dense for the VPU/store work inside the kernel.
    # TODO(synk): hoist this layout into the surrounding model so the permutes
    # around the pallas_call disappear (they are separate XLA HBM round trips).
    W = B * C
    y = jnp.transpose(x, (1, 0, 2)).reshape(1, L, W)
    out = _run_pallas(y, kernel_size, stride, L, L_out, pad, n_acc, head)
    return jnp.transpose(out.reshape(L_out, B, C), (1, 0, 2))


def _moving_avg_ref(x, kernel_size, stride):
    """Pure-JAX reference mirroring the PyTorch module."""
    pad = (kernel_size - 1) // 2
    front = jnp.repeat(x[:, 0:1, :], pad, axis=1)
    end = jnp.repeat(x[:, -1:, :], pad, axis=1)
    xp = jnp.concatenate([front, x, end], axis=1)        # (B, L_pad, C)
    L_pad = xp.shape[1]
    L_out = (L_pad - kernel_size) // stride + 1
    taps = [xp[:, k:k + (L_out - 1) * stride + 1:stride, :]
            for k in range(kernel_size)]
    return sum(taps) / kernel_size


if __name__ == "__main__":
    key = jax.random.PRNGKey(0)

    # (kernel_size, stride, B, L, C)
    configs = [
        (5, 1, 2, 16, 8),      # small smoke test (lane-packed path)
        (25, 1, 4, 96, 7),     # typical mrDiff trend window (lane-packed path)
        (4, 1, 3, 32, 16),     # even kernel size, ragged batch tiling
        (25, 1, 48, 96, 7),    # wide packed width -> 2 lane tiles (megacore)
        (7, 1, 2, 48, 128),    # channel-dense: natural (B, L, C) path, no permutes
    ]
    for i, (ks, st, B, L, C) in enumerate(configs):
        x = jax.random.normal(jax.random.fold_in(key, i), (B, L, C),
                              dtype=jnp.float32)
        out = jax.block_until_ready(moving_avg(x, ks, st))
        ref = _moving_avg_ref(x, ks, st)
        assert out.shape == ref.shape, (out.shape, ref.shape)
        assert jnp.allclose(out, ref, atol=1e-5, rtol=1e-5), \
            f"mismatch vs reference for config {(ks, st, B, L, C)}"

    print("KERNEL_OK")
</pallas_src>

<mosaic_0001>
module attributes {stable_mosaic.version = 11 : i64} {
  func.func @_moving_avg_kernel(%arg0: i32, %arg1: i32, %arg2: memref<1x16x16xf32, #tpu.memory_space<vmem>>, %arg3: memref<1x16x16xf32, #tpu.memory_space<vmem>>, %arg4: memref<1x26x16xf32, #tpu.memory_space<vmem>>) attributes {dimension_semantics = [#tpu.dimension_semantics<parallel>, #tpu.dimension_semantics<parallel>], iteration_bounds = array<i64: 1, 1>, scalar_prefetch = 0 : i64, scratch_operands = 1 : i64, tpu.core_type = #tpu.core_type<tc>, window_params = [{transform_indices = @transform_0, window_bounds = array<i64: 1, 16, 16>}, {transform_indices = @transform_1, window_bounds = array<i64: 1, 16, 16>}]} {
    %c0 = arith.constant 0 : index
    %c0_0 = arith.constant 0 : index
    %c0_1 = arith.constant 0 : index
    %0 = vector.load %arg2[%c0, %c0_0, %c0_1] : memref<1x16x16xf32, #tpu.memory_space<vmem>>, vector<1x16x16xf32>
    %1 = vector.extract_strided_slice %0 {offsets = [0, 0, 0], sizes = [1, 1, 16], strides = [1, 1, 1]} : vector<1x16x16xf32> to vector<1x1x16xf32>
    %2 = vector.shape_cast %1 : vector<1x1x16xf32> to vector<1x1x16xf32>
    %3 = vector.broadcast %2 : vector<1x1x16xf32> to vector<1x8x16xf32>
    %c0_2 = arith.constant 0 : index
    %c0_3 = arith.constant 0 : index
    %c0_4 = arith.constant 0 : index
    %4 = vector.load %arg4[%c0_2, %c0_3, %c0_4] : memref<1x26x16xf32, #tpu.memory_space<vmem>>, vector<1x8x16xf32>
    tpu.vector_store %arg4[%c0_2, %c0_3, %c0_4], %3 {strides = array<i32>} : memref<1x26x16xf32, #tpu.memory_space<vmem>>, vector<1x8x16xf32>,
    %c0_5 = arith.constant 0 : index
    %c8 = arith.constant 8 : index
    %c0_6 = arith.constant 0 : index
    %5 = vector.load %arg4[%c0_5, %c8, %c0_6] : memref<1x26x16xf32, #tpu.memory_space<vmem>>, vector<1x16x16xf32>
    tpu.vector_store %arg4[%c0_5, %c8, %c0_6], %0 {strides = array<i32>} : memref<1x26x16xf32, #tpu.memory_space<vmem>>, vector<1x16x16xf32>,
    %6 = vector.extract_strided_slice %0 {offsets = [0, 15, 0], sizes = [1, 1, 16], strides = [1, 1, 1]} : vector<1x16x16xf32> to vector<1x1x16xf32>
    %7 = vector.shape_cast %6 : vector<1x1x16xf32> to vector<1x1x16xf32>
    %8 = vector.broadcast %7 : vector<1x1x16xf32> to vector<1x2x16xf32>
    %c0_7 = arith.constant 0 : index
    %c24 = arith.constant 24 : index
    %c0_8 = arith.constant 0 : index
    %9 = vector.load %arg4[%c0_7, %c24, %c0_8] : memref<1x26x16xf32, #tpu.memory_space<vmem>>, vector<1x2x16xf32>
    tpu.vector_store %arg4[%c0_7, %c24, %c0_8], %8 {strides = array<i32>} : memref<1x26x16xf32, #tpu.memory_space<vmem>>, vector<1x2x16xf32>,
    %c0_9 = arith.constant 0 : index
    %c0_10 = arith.constant 0 : index
    %c0_11 = arith.constant 0 : index
    %10 = vector.load %arg4[%c0_9, %c0_10, %c0_11] : memref<1x26x16xf32, #tpu.memory_space<vmem>>, vector<1x26x16xf32>
    %11 = vector.extract_strided_slice %10 {offsets = [0, 6, 0], sizes = [1, 16, 16], strides = [1, 1, 1]} : vector<1x26x16xf32> to vector<1x16x16xf32>
    %12 = vector.extract_strided_slice %10 {offsets = [0, 0, 0], sizes = [1, 25, 16], strides = [1, 1, 1]} : vector<1x26x16xf32> to vector<1x25x16xf32>
    %13 = vector.extract_strided_slice %10 {offsets = [0, 1, 0], sizes = [1, 25, 16], strides = [1, 1, 1]} : vector<1x26x16xf32> to vector<1x25x16xf32>
    %14 = arith.addf %12, %13 : vector<1x25x16xf32>
    %15 = vector.extract_strided_slice %14 {offsets = [0, 0, 0], sizes = [1, 23, 16], strides = [1, 1, 1]} : vector<1x25x16xf32> to vector<1x23x16xf32>
    %16 = vector.extract_strided_slice %14 {offsets = [0, 2, 0], sizes = [1, 23, 16], strides = [1, 1, 1]} : vector<1x25x16xf32> to vector<1x23x16xf32>
    %17 = arith.addf %15, %16 : vector<1x23x16xf32>
    %18 = vector.extract_strided_slice %17 {offsets = [0, 7, 0], sizes = [1, 16, 16], strides = [1, 1, 1]} : vector<1x23x16xf32> to vector<1x16x16xf32>
    %19 = arith.addf %11, %18 : vector<1x16x16xf32>
    %cst = arith.constant 2.000000e-01 : f32
    %20 = vector.broadcast %cst : f32 to vector<1x16x16xf32>
    %21 = arith.mulf %19, %20 : vector<1x16x16xf32>
    %c0_12 = arith.constant 0 : index
    %c0_13 = arith.constant 0 : index
    %c0_14 = arith.constant 0 : index
    %22 = vector.load %arg3[%c0_12, %c0_13, %c0_14] : memref<1x16x16xf32, #tpu.memory_space<vmem>>, vector<1x16x16xf32>
    tpu.vector_store %arg3[%c0_12, %c0_13, %c0_14], %21 {strides = array<i32>} : memref<1x16x16xf32, #tpu.memory_space<vmem>>, vector<1x16x16xf32>,
    return
  }
  func.func @transform_0(%arg0: i32, %arg1: i32) -> (i32, i32, i32) {
    %c0_i32 = arith.constant 0 : i32
    %c0_i32_0 = arith.constant 0 : i32
    return %arg0, %c0_i32, %arg1 : i32, i32, i32
  }
  func.func @transform_1(%arg0: i32, %arg1: i32) -> (i32, i32, i32) {
    %c0_i32 = arith.constant 0 : i32
    %c0_i32_0 = arith.constant 0 : i32
    return %arg0, %c0_i32, %arg1 : i32, i32, i32
  }
}

</mosaic_0001>

<llo_original>
// kernel: tpu_custom_call.1
$region0: #{tpu_custom_call.1}
  #allocation0 [shape = 'u32[]', space=smem, size = 0x4, offset = 0x4, fixed_abs, tag = 'smem constant byte address 0x4 - core index']
  #allocation1 [shape = 'u32[144,128]{1,0:T(1,128)}', space=vmem, size = 0x12000, scoped, tag = 'internal scratch']
  #allocation2 [shape = 'f32[1,26,16]{2,1,0:T(8,128)}', space=vmem, size = 0x4000, scoped, tag = 'scratch operand']
  %s0 = inlined_call_operand.hbm [shape: f32[1,16,16], index: 0, kind: input, shape index: {}]
  %s1 = inlined_call_operand.hbm [shape: f32[1,16,16], index: 1, kind: output, shape index: {}]
  %s2 = sld [smem:[#allocation0]]
  $region18: #{tpu_custom_call.1} parent=0
    _
  %s4 = ssub.s32 1, %s2
  %s5 = scalar_select 0, %s4, %s2
  $region1: #{tpu_custom_call.1} parent=0
    #allocation3 [shape = 'u8[8192]{0}', space=vmem, size = 0x2000, scoped, tag = 'input window, operand 0, single buffered']
    #allocation4 [shape = 's32[1]{0}', space=sflag, size = 0x4, scoped, tag = 'scoped memory for tpu_custom_call.1']
    #allocation5 [shape = 's32[1]{0}', space=sflag, size = 0x4, scoped, tag = 'scoped memory for tpu_custom_call.1']
    #allocation6 [shape = 'u8[8192]{0}', space=vmem, size = 0x2000, scoped, tag = 'output window, operand 0, single buffered']
    %6 = vsyncpa [#allocation4], 0
    %7 = vsyncpa [#allocation5], 0
    // Predicated region
    $region2: #{tpu_custom_call.1} parent=1 // pred_check
      _
    $region3: #{tpu_custom_call.1} parent=1 // pred_check_branch
      %9 = sbr.rel (0) target = $region5
    $region4: #{tpu_custom_call.1} parent=1 // pred_region
      %s11 = ssub.s32 256, 256
      %12 = vsyncadd [#allocation4], %s11
      %s13 = sshll.u32 [#allocation3], 4
      %s14 = int_to_ptr.vmem [resolvable:$true] %s13
      %19 = dma.hbm_to_vmem [thread:$0]  %s0, 256, %s14, [#allocation4], 128, 128, 8
    $region5: #{tpu_custom_call.1} parent=1 // pred_fallthru
      _
    // Predicated region
    $region6: #{tpu_custom_call.1} parent=1 // pred_check
      _
    $region7: #{tpu_custom_call.1} parent=1 // pred_check_branch
      %21 = sbr.rel (0) target = $region9
    $region8: #{tpu_custom_call.1} parent=1 // pred_region
      %22 = dma.done [#allocation4], 256
    $region9: #{tpu_custom_call.1} parent=1 // pred_fallthru
      _
    %v23 = vld [vmem:[#allocation3] sm:$0xff]
    %v24 = vld [vmem:[#allocation3 + $0x8] sm:$0xff]
    %v25 = vlaneseq
    %v26 = vshrl.u32 %v25, 7
    %v27 = vsub.s32 0, %v26
    %v28 = vrot.slane %v23, %v27
    %vm29 = vcmask 130048
    %30 = vst.msk [vmem:[#allocation2] sm:$0xff] %vm29, %v28
    %31 = vst.msk [vmem:[#allocation2 + $0x8] sm:$0xff] %vm29, %v23
    %32 = vst.msk [vmem:[#allocation2 + $0x10] sm:$0xff] %vm29, %v24
    %v33 = vlaneseq
    %v34 = vshrl.u32 %v33, 7
    %v35 = vsub.s32 7, %v34
    %v36 = vrot.slane %v24, %v35
    %vm37 = vcmask 123904
    %38 = vst.msk [vmem:[#allocation2 + $0x18] sm:$0x3] %vm37, %v36
    %v39 = vld [vmem:[#allocation2] sm:$0xff]
    %v40 = vld [vmem:[#allocation2 + $0x8] sm:$0xff]
    %v41 = vld [vmem:[#allocation2 + $0x10] sm:$0xff]
    %v42 = vld [vmem:[#allocation2 + $0x18] sm:$0x3]
    %vm47 = vcmask 1046528
    %v48 = vrot.slane %v39, 1
    %v49 = vrot.slane %v40, 1
    %v50 = vsel %vm47, %v48, %v49
    %v51 = vrot.slane %v41, 1
    %v52 = vsel %vm47, %v49, %v51
    %v53 = vrot.slane %v42, 1
    %v54 = vsel %vm47, %v51, %v53
    %v59 = vadd.f32 %v39, %v50
    %v60 = vadd.f32 %v40, %v52
    %v61 = vadd.f32 %v41, %v54
    %v62 = vadd.f32 %v42, %v53
    %vm67 = vcmask 1045504
    %v68 = vrot.slane %v59, 2
    %v69 = vrot.slane %v60, 2
    %v70 = vsel %vm67, %v68, %v69
    %v71 = vrot.slane %v61, 2
    %v72 = vsel %vm67, %v69, %v71
    %v73 = vrot.slane %v62, 2
    %v74 = vsel %vm67, %v71, %v73
    %v78 = vadd.f32 %v59, %v70
    %v79 = vadd.f32 %v60, %v72
    %v80 = vadd.f32 %v61, %v74
    %v84 = vrot.slane %v78, 1
    %v85 = vrot.slane %v79, 1
    %v86 = vsel %vm47, %v84, %v85
    %v87 = vrot.slane %v80, 1
    %v88 = vsel %vm47, %v85, %v87
    %v92 = vadd.f32 %v39, %v86
    %v93 = vadd.f32 %v40, %v88
    %v94 = vadd.f32 %v41, %v87
    %v95 = vmul.f32 %v92, 0.2
    %v96 = vmul.f32 %v93, 0.2
    %v97 = vmul.f32 %v94, 0.2
    %vm98 = vcmask 130054
    %99 = vst.msk [vmem:[#allocation6 - $0x6] sm:$0xc0] %vm98, %v95
    %100 = vst.msk [vmem:[#allocation6 + $0x2] sm:$0xff] %vm29, %v96
    %vm101 = vcmask 128000
    %102 = vst.msk [vmem:[#allocation6 + $0xa] sm:$0x3f] %vm101, %v97
    // Predicated region
    $region10: #{tpu_custom_call.1} parent=1 // pred_check
      _
    $region11: #{tpu_custom_call.1} parent=1 // pred_check_branch
      %104 = sbr.rel (0) target = $region13
    $region12: #{tpu_custom_call.1} parent=1 // pred_region
      %s106 = ssub.s32 256, 256
      %107 = vsyncadd [#allocation5], %s106
      %s108 = sshll.u32 [#allocation6], 4
      %s109 = int_to_ptr.vmem [resolvable:$true] %s108
      %114 = dma.vmem_to_hbm [thread:$0]  %s109, 256, %s1, [#allocation5], 128, 128, 8
    $region13: #{tpu_custom_call.1} parent=1 // pred_fallthru
      _
    // Predicated region
    $region14: #{tpu_custom_call.1} parent=1 // pred_check
      _
    $region15: #{tpu_custom_call.1} parent=1 // pred_check_branch
      %116 = sbr.rel (0) target = $region17
    $region16: #{tpu_custom_call.1} parent=1 // pred_region
      %117 = dma.done [#allocation5], 256
    $region17: #{tpu_custom_call.1} parent=1 // pred_fallthru
      _
    %118 = vsyncpa [#allocation4], 1
    %119 = vsyncpa [#allocation5], 1

</llo_original>
